<compile_context>
chip_gen: v5e
topology: v5e:2x2
jax: 0.10.0
libtpu: 0.0.40
codegen_flags: <defaults>
</compile_context>

<pallas_src>
import functools
import math

import jax
import jax.numpy as jnp
from jax.experimental import pallas as pl
from jax.experimental.pallas import tpu as pltpu

_LANE = 128      # lane width: last-dim tiling
_SUBLANE = 8     # f32 sublane tiling for second-to-last dim


def _round_up(x, m):
    return ((x + m - 1) // m) * m


def _vmem_capacity_bytes():
    """Per-core VMEM capacity (generation-aware), with a conservative fallback."""
    try:
        cap = int(pltpu.get_tpu_info().vmem_capacity_bytes)
        if cap > 0:
            return cap
    except Exception:
        pass
    return 64 * 1024 * 1024   # v7x per-TC size: the most conservative default


def _make_fused_mlp_kernel(num_layers):
    """Kernel: full Linear+ReLU chain on one batch tile; weights stay in VMEM."""

    def kernel(*refs):
        x_ref = refs[0]
        o_ref = refs[-1]
        wb_refs = refs[1:-1]                  # (w0, b0, w1, b1, ...)
        h = x_ref[...].astype(jnp.float32)
        for l in range(num_layers):
            w = wb_refs[2 * l][...]           # bf16, VMEM-resident
            b = wb_refs[2 * l + 1][...]       # f32 (1, n_pad) row, broadcasts over rows
            # bf16 MXU inputs, f32 accumulation.
            h = jnp.dot(h.astype(jnp.bfloat16), w,
                        preferred_element_type=jnp.float32)
            h = jnp.maximum(h + b, 0.0)
        o_ref[...] = h.astype(o_ref.dtype)

    return kernel


def _fused_mlp(x_pad, weights, biases, *, tm, out_dtype, vmem_budget):
    """x_pad: (m_pad, d_in); weights[l]: bf16 (d_l, d_{l+1}_pad); biases[l]: f32 (1, d_{l+1}_pad)."""
    num_layers = len(weights)
    m_pad, d_in = x_pad.shape
    d_out = weights[-1].shape[1]
    grid = (m_pad // tm,)

    in_specs = [pl.BlockSpec((tm, d_in), lambda i: (i, 0))]
    for w, b in zip(weights, biases):
        # Constant block index + single buffer: each weight/bias is fetched once
        # and stays VMEM-resident across all batch tiles (no double-buffer waste).
        in_specs.append(pl.BlockSpec(w.shape, lambda i: (0, 0),
                                     pipeline_mode=pl.Buffered(1)))
        in_specs.append(pl.BlockSpec(b.shape, lambda i: (0, 0),
                                     pipeline_mode=pl.Buffered(1)))
    out_specs = pl.BlockSpec((tm, d_out), lambda i: (i, 0))

    # VMEM estimate: single-buffered params + double-buffered activation tiles.
    param_bytes = sum(w.size * w.dtype.itemsize for w in weights) \
                + sum(b.size * b.dtype.itemsize for b in biases)
    max_width = max(w.shape[1] for w in weights)
    act_bytes = 4 * tm * (2 * d_in + 2 * d_out + 2 * max_width)
    est_bytes = param_bytes + act_bytes

    compiler_kwargs = dict(dimension_semantics=("parallel",))
    if est_bytes > 12 * 1024 * 1024:
        compiler_kwargs["vmem_limit_bytes"] = int(
            min(vmem_budget, max(int(1.5 * est_bytes), 32 * 1024 * 1024)))

    args = [x_pad]
    for w, b in zip(weights, biases):
        args.append(w)
        args.append(b)

    return pl.pallas_call(
        _make_fused_mlp_kernel(num_layers),
        out_shape=jax.ShapeDtypeStruct((m_pad, d_out), out_dtype),
        grid_spec=pltpu.PrefetchScalarGridSpec(
            num_scalar_prefetch=0,
            grid=grid,
            in_specs=in_specs,
            out_specs=out_specs,
        ),
        compiler_params=pltpu.CompilerParams(**compiler_kwargs),
    )(*args)


@functools.partial(jax.jit,
                   static_argnames=("tm", "true_n", "group_sizes", "vmem_budget"))
def _mlp_forward(x, weights, biases, *, tm, true_n, group_sizes, vmem_budget):
    M = x.shape[0]
    m_pad = tm * (-(-M // tm))                      # round batch up to tile multiple
    h = x if m_pad == M else jnp.pad(x, ((0, m_pad - M), (0, 0)))   # rows only
    idx = 0
    for g in group_sizes:
        h = _fused_mlp(h, weights[idx:idx + g], biases[idx:idx + g],
                       tm=tm, out_dtype=jnp.float32, vmem_budget=vmem_budget)
        idx += g
    # TODO(synk): optionally return bf16 here if downstream tolerates it (halves
    # the final HBM write at large batch).
    return h[:M, :true_n]


class DNN:
    """JAX/Pallas port of the PyTorch DNN module (relu activation, no BN, no dropout)."""

    def __init__(self, input_dims, hidden_units, init_std=1e-4, seed=1024):
        if len(hidden_units) == 0:
            raise ValueError("hidden units is empty!")
        dims = [input_dims] + list(hidden_units)
        self.dims = dims
        key = jax.random.PRNGKey(seed)
        self.weights = []
        self.biases = []
        for i in range(len(dims) - 1):
            key, kw, kb = jax.random.split(key, 3)
            fan_in, fan_out = dims[i], dims[i + 1]
            # nn.init.normal_(weight, mean=0, std=init_std); stored as (in, out)
            w = init_std * jax.random.normal(kw, (fan_in, fan_out), jnp.float32)
            # nn.Linear default bias init: U(-1/sqrt(fan_in), 1/sqrt(fan_in))
            bound = 1.0 / math.sqrt(fan_in)
            b = jax.random.uniform(kb, (fan_out,), jnp.float32, -bound, bound)
            self.weights.append(w)
            self.biases.append(b)

        # Hidden/output dims padded to 128 lanes (dense vst); the input K dim is
        # NOT padded (block == full array dim satisfies the tiling rule and
        # avoids mostly-zero layer-0 MXU work).  Weights stored bf16 for the MXU;
        # biases stay f32 as (1, N_pad) rows.  Zero padding is exact.
        dims_pad = [dims[0]] + [_round_up(d, _LANE) for d in dims[1:]]
        self.dims_pad = dims_pad
        self.weights_pad = tuple(
            jnp.pad(w, ((0, dims_pad[i] - w.shape[0]),
                        (0, dims_pad[i + 1] - w.shape[1]))).astype(jnp.bfloat16)
            for i, w in enumerate(self.weights))
        self.biases_pad = tuple(
            jnp.pad(b, (0, dims_pad[i + 1] - b.shape[0])).reshape(1, dims_pad[i + 1])
            for i, b in enumerate(self.biases))

        # Generation-aware VMEM budget and greedy layer grouping (weight-streaming
        # fallback for parameter stacks that don't fit v7x's 64 MiB per-TC VMEM).
        self._vmem_budget = int(0.72 * _vmem_capacity_bytes())
        param_budget = int(0.55 * self._vmem_budget)
        groups, cur, cur_bytes, max_group_bytes = [], 0, 0, 0
        for w, b in zip(self.weights_pad, self.biases_pad):
            layer_bytes = w.size * 2 + b.size * 4
            if cur > 0 and cur_bytes + layer_bytes > param_budget:
                groups.append(cur)
                max_group_bytes = max(max_group_bytes, cur_bytes)
                cur, cur_bytes = 0, 0
            cur += 1
            cur_bytes += layer_bytes
        groups.append(cur)
        max_group_bytes = max(max_group_bytes, cur_bytes)
        self._group_sizes = tuple(groups)
        # TODO(synk): if a single layer alone exceeds the budget, stream its N dim
        # on an extra 'arbitrary' grid axis instead of relying on the VMEM limit.

        # Largest batch tile the leftover VMEM supports (rough per-row estimate:
        # double-buffered in/out tiles + two live f32 intermediates of the widest dim).
        per_row_bytes = 4 * 6 * max(dims_pad)
        avail = max(self._vmem_budget - max_group_bytes, _SUBLANE * per_row_bytes)
        self._tm_cap = max(_SUBLANE, (avail // per_row_bytes) // _SUBLANE * _SUBLANE)

    def _choose_tm(self, M):
        m8 = _round_up(max(int(M), 1), _SUBLANE)
        if m8 <= _SUBLANE:
            tm = m8
        else:
            # >=2 parallel grid steps (both v7x TensorCores get work) and a large
            # tile (up to 512 rows) to amortize per-step grid overhead.
            tm = min(512, _round_up((m8 + 1) // 2, _SUBLANE))
        return max(_SUBLANE, min(tm, self._tm_cap))

    def __call__(self, inputs):
        # TODO(synk): BatchNorm1d (use_bn=True) and Dropout(p>0) paths not implemented
        # since the module defaults disable them.
        tm = self._choose_tm(inputs.shape[0])
        return _mlp_forward(inputs, self.weights_pad, self.biases_pad,
                            tm=tm, true_n=self.dims[-1],
                            group_sizes=self._group_sizes,
                            vmem_budget=self._vmem_budget)


if __name__ == "__main__":
    batch = 16
    input_dims = 32
    hidden_units = (64, 32)

    key = jax.random.PRNGKey(0)
    x = jax.random.normal(key, (batch, input_dims), jnp.float32)

    model = DNN(input_dims, hidden_units)
    out = jax.block_until_ready(model(x))

    # sanity checks against pure-JAX f32 reference; tolerance relaxed for the
    # bf16 matmul-input path (error is still tiny because outputs are bias-dominated)
    ref = x
    for w, b in zip(model.weights, model.biases):
        ref = jnp.maximum(ref @ w + b, 0.0)
    assert out.shape == (batch, hidden_units[-1])
    assert jnp.allclose(out, ref, atol=1e-3, rtol=1e-2)

    print("KERNEL_OK")
</pallas_src>

<mosaic_0001>
module attributes {stable_mosaic.version = 11 : i64} {
  func.func @kernel(%arg0: i32, %arg1: memref<8x32xf32, #tpu.memory_space<vmem>>, %arg2: memref<32x128xbf16, #tpu.memory_space<vmem>>, %arg3: memref<1x128xf32, #tpu.memory_space<vmem>>, %arg4: memref<128x128xbf16, #tpu.memory_space<vmem>>, %arg5: memref<1x128xf32, #tpu.memory_space<vmem>>, %arg6: memref<8x128xf32, #tpu.memory_space<vmem>>) attributes {dimension_semantics = [#tpu.dimension_semantics<parallel>], iteration_bounds = array<i64: 2>, scalar_prefetch = 0 : i64, scratch_operands = 0 : i64, tpu.core_type = #tpu.core_type<tc>, window_params = [{transform_indices = @transform_0, window_bounds = array<i64: 8, 32>}, {pipeline_mode = #tpu.pipeline_mode<synchronous>, transform_indices = @transform_1, window_bounds = array<i64: 32, 128>}, {pipeline_mode = #tpu.pipeline_mode<synchronous>, transform_indices = @transform_2, window_bounds = array<i64: 1, 128>}, {pipeline_mode = #tpu.pipeline_mode<synchronous>, transform_indices = @transform_3, window_bounds = array<i64: 128, 128>}, {pipeline_mode = #tpu.pipeline_mode<synchronous>, transform_indices = @transform_4, window_bounds = array<i64: 1, 128>}, {transform_indices = @transform_5, window_bounds = array<i64: 8, 128>}]} {
    %c0 = arith.constant 0 : index
    %c0_0 = arith.constant 0 : index
    %0 = vector.load %arg1[%c0, %c0_0] : memref<8x32xf32, #tpu.memory_space<vmem>>, vector<8x32xf32>
    %c0_1 = arith.constant 0 : index
    %c0_2 = arith.constant 0 : index
    %1 = vector.load %arg2[%c0_1, %c0_2] : memref<32x128xbf16, #tpu.memory_space<vmem>>, vector<32x128xbf16>
    %c0_3 = arith.constant 0 : index
    %c0_4 = arith.constant 0 : index
    %2 = vector.load %arg3[%c0_3, %c0_4] : memref<1x128xf32, #tpu.memory_space<vmem>>, vector<1x128xf32>
    %3 = arith.truncf %0 : vector<8x32xf32> to vector<8x32xbf16>
    %cst = arith.constant dense<0.000000e+00> : vector<8x128xf32>
    %4 = tpu.matmul %3, %1, %cst {dimension_numbers = #tpu.dot_dimension_numbers<[1], [0], [0], [1], [0, 0, 1, 1], [], []>} : vector<8x32xbf16>, vector<32x128xbf16>, vector<8x128xf32> -> vector<8x128xf32>
    %5 = vector.broadcast %2 : vector<1x128xf32> to vector<8x128xf32>
    %6 = arith.addf %4, %5 : vector<8x128xf32>
    %cst_5 = arith.constant 0.000000e+00 : f32
    %7 = vector.broadcast %cst_5 : f32 to vector<8x128xf32>
    %8 = arith.maximumf %6, %7 : vector<8x128xf32>
    %c0_6 = arith.constant 0 : index
    %c0_7 = arith.constant 0 : index
    %9 = vector.load %arg4[%c0_6, %c0_7] : memref<128x128xbf16, #tpu.memory_space<vmem>>, vector<128x128xbf16>
    %c0_8 = arith.constant 0 : index
    %c0_9 = arith.constant 0 : index
    %10 = vector.load %arg5[%c0_8, %c0_9] : memref<1x128xf32, #tpu.memory_space<vmem>>, vector<1x128xf32>
    %11 = arith.truncf %8 : vector<8x128xf32> to vector<8x128xbf16>
    %cst_10 = arith.constant dense<0.000000e+00> : vector<8x128xf32>
    %12 = tpu.matmul %11, %9, %cst_10 {dimension_numbers = #tpu.dot_dimension_numbers<[1], [0], [0], [1], [0, 0, 1, 1], [], []>} : vector<8x128xbf16>, vector<128x128xbf16>, vector<8x128xf32> -> vector<8x128xf32>
    %13 = vector.broadcast %10 : vector<1x128xf32> to vector<8x128xf32>
    %14 = arith.addf %12, %13 : vector<8x128xf32>
    %cst_11 = arith.constant 0.000000e+00 : f32
    %15 = vector.broadcast %cst_11 : f32 to vector<8x128xf32>
    %16 = arith.maximumf %14, %15 : vector<8x128xf32>
    %c0_12 = arith.constant 0 : index
    %c0_13 = arith.constant 0 : index
    %17 = vector.load %arg6[%c0_12, %c0_13] : memref<8x128xf32, #tpu.memory_space<vmem>>, vector<8x128xf32>
    tpu.vector_store %arg6[%c0_12, %c0_13], %16 {strides = array<i32>} : memref<8x128xf32, #tpu.memory_space<vmem>>, vector<8x128xf32>,
    return
  }
  func.func @transform_0(%arg0: i32) -> (i32, i32) {
    %c0_i32 = arith.constant 0 : i32
    %c0_i32_0 = arith.constant 0 : i32
    return %arg0, %c0_i32 : i32, i32
  }
  func.func @transform_1(%arg0: i32) -> (i32, i32) {
    %c0_i32 = arith.constant 0 : i32
    %c0_i32_0 = arith.constant 0 : i32
    %c0_i32_1 = arith.constant 0 : i32
    return %c0_i32, %c0_i32_0 : i32, i32
  }
  func.func @transform_2(%arg0: i32) -> (i32, i32) {
    %c0_i32 = arith.constant 0 : i32
    %c0_i32_0 = arith.constant 0 : i32
    %c0_i32_1 = arith.constant 0 : i32
    return %c0_i32, %c0_i32_0 : i32, i32
  }
  func.func @transform_3(%arg0: i32) -> (i32, i32) {
    %c0_i32 = arith.constant 0 : i32
    %c0_i32_0 = arith.constant 0 : i32
    %c0_i32_1 = arith.constant 0 : i32
    return %c0_i32, %c0_i32_0 : i32, i32
  }
  func.func @transform_4(%arg0: i32) -> (i32, i32) {
    %c0_i32 = arith.constant 0 : i32
    %c0_i32_0 = arith.constant 0 : i32
    %c0_i32_1 = arith.constant 0 : i32
    return %c0_i32, %c0_i32_0 : i32, i32
  }
  func.func @transform_5(%arg0: i32) -> (i32, i32) {
    %c0_i32 = arith.constant 0 : i32
    %c0_i32_0 = arith.constant 0 : i32
    return %arg0, %c0_i32 : i32, i32
  }
}

</mosaic_0001>

<llo_original>
// kernel: _mlp_forward.1
$region0: #{_mlp_forward.1}
  #allocation0 [shape = 'u32[]', space=smem, size = 0x4, offset = 0x4, fixed_abs, tag = 'smem constant byte address 0x4 - core index']
  #allocation1 [shape = 'u32[72,128]{1,0:T(1,128)}', space=vmem, size = 0x9000, scoped, tag = 'internal scratch']
  %s0 = inlined_call_operand.hbm [shape: f32[16,32], index: 0, kind: input, shape index: {}]
  %s1 = inlined_call_operand.hbm [shape: bf16[32,128], index: 1, kind: input, shape index: {}]
  %s2 = inlined_call_operand.vmem [shape: f32[1,128], index: 2, kind: input, shape index: {}]
  %s3 = inlined_call_operand.hbm [shape: bf16[128,128], index: 3, kind: input, shape index: {}]
  %s4 = inlined_call_operand.vmem [shape: f32[1,128], index: 4, kind: input, shape index: {}]
  %s5 = inlined_call_operand.hbm [shape: f32[16,128], index: 5, kind: output, shape index: {}]
  %s6 = sld [smem:[#allocation0]]
  $region65: #{_mlp_forward.1} parent=0
    _
  %s8 = ssub.s32 1, %s6
  %s9 = scalar_select 0, %s8, %s6
  $region1: #{_mlp_forward.1} parent=0
    #allocation2 [shape = 'u8[8192]{0}', space=vmem, size = 0x2000, scoped, tag = 'input window, operand 0']
    #allocation3 [shape = 's32[2]{0}', space=sflag, size = 0x8, scoped, tag = 'scoped memory for _mlp_forward.1']
    #allocation4 [shape = 's32[2]{0}', space=sflag, size = 0x8, scoped, tag = 'scoped memory for _mlp_forward.1']
    #allocation5 [shape = 'u8[8192]{0}', space=vmem, size = 0x2000, scoped, tag = 'input window, operand 1, single buffered']
    #allocation6 [shape = 's32[1]{0}', space=sflag, size = 0x4, scoped, tag = 'scoped memory for _mlp_forward.1']
    #allocation7 [shape = 'u8[32768]{0}', space=vmem, size = 0x8000, scoped, tag = 'input window, operand 3, single buffered']
    #allocation8 [shape = 'u8[8192]{0}', space=vmem, size = 0x2000, scoped, tag = 'output window, operand 0']
    %10 = vsyncpa [#allocation3], 0
    %s11 = scalar_lea.sflag [#allocation3], 1
    %12 = vsyncpa %s11, 0
    %13 = vsyncpa [#allocation6], 0
    %14 = vsyncpa [#allocation4], 0
    %s15 = scalar_lea.sflag [#allocation4], 1
    %16 = vsyncpa %s15, 0
    loop: start=0, step=1, limit=4
    $region2: #{_mlp_forward.1} parent=1 // loop_pre_header
      _
    $region3: #{_mlp_forward.1} parent=1 // loop_header
      %s18 = sphi 0, %s22
      %p19 = scmp.ge.s32.totalorder %s18, 4
      %s28 = sphi 0, %s30
      %s31 = sphi 0, %s28
      %s32 = sphi 0, %s31
      %s48 = sphi 0, %s32
      %s52 = sphi 0, %s52
      %s54 = sphi 0, %s52
      %s55 = sphi 0, %s54
      %s69 = sphi 0, %s55
      %s73 = sphi 0, %s73
      %s75 = sphi 0, %s73
      %s76 = sphi 0, %s75
      %s90 = sphi 0, %s76
      %s94 = sphi 0, %s94
      %s96 = sphi 0, %s94
      %s97 = sphi 0, %s96
      %s111 = sphi 0, %s97
      %s115 = sphi 0, %s115
      %s117 = sphi 0, %s115
      %s118 = sphi 0, %s117
      %s132 = sphi 0, %s118
      %s138 = sphi 0, %s140
      %s141 = sphi 0, %s138
      %s142 = sphi 0, %s141
      %s158 = sphi 0, %s142
    $region4: #{_mlp_forward.1} parent=1 // loop_header_branch
      %21 = sbr.rel (%p19) target = $region8
    $region5: #{_mlp_forward.1} parent=1 // loop_body
      %s23 = ssub.s32 %s18, 1
      %s24 = ssub.s32 %s18, 2
      %s25 = sadd.s32 %s18, 1
      %s26 = ssub.s32 %s18, %s25
      %p27 = scmp.eq.s32.totalorder %s26, 0
      %s29 = sadd.s32 %s28, 1
      %s30 = scalar_select %p27, %s28, %s29
      %p33 = pneg %p27
      %p34 = scmp.eq.s32.totalorder %s18, 1
      %p35 = por %p33, %p34
      %p36 = scmp.ne.s32.totalorder %s28, %s31
      %p37 = scmp.eq.s32.totalorder %s18, 0
      %p38 = por %p36, %p37
      %p39 = scmp.ne.s32.totalorder %s28, %s31
      %p40 = scmp.eq.s32.totalorder %s23, 1
      %p41 = por %p39, %p40
      %p42 = scmp.ne.s32.totalorder %s31, %s32
      %p43 = scmp.eq.s32.totalorder %s23, 0
      %p44 = por %p42, %p43
      %p45 = scmp.ne.s32.totalorder %s31, %s32
      %p46 = scmp.eq.s32.totalorder %s24, 1
      %p47 = por %p45, %p46
      %p49 = scmp.ne.s32.totalorder %s32, %s48
      %p50 = scmp.eq.s32.totalorder %s24, 0
      %p51 = por %p49, %p50
      %s53 = sadd.s32 %s52, 1
      %p56 = scmp.eq.s32.totalorder %s18, 1
      %p57 = scmp.ne.s32.totalorder %s52, %s54
      %p58 = scmp.eq.s32.totalorder %s18, 0
      %p59 = por %p57, %p58
      %p60 = scmp.ne.s32.totalorder %s52, %s54
      %p61 = scmp.eq.s32.totalorder %s23, 1
      %p62 = por %p60, %p61
      %p63 = scmp.ne.s32.totalorder %s54, %s55
      %p64 = scmp.eq.s32.totalorder %s23, 0
      %p65 = por %p63, %p64
      %p66 = scmp.ne.s32.totalorder %s54, %s55
      %p67 = scmp.eq.s32.totalorder %s24, 1
      %p68 = por %p66, %p67
      %p70 = scmp.ne.s32.totalorder %s55, %s69
      %p71 = scmp.eq.s32.totalorder %s24, 0
      %p72 = por %p70, %p71
      %s74 = sadd.s32 %s73, 1
      %p77 = scmp.eq.s32.totalorder %s18, 1
      %p78 = scmp.ne.s32.totalorder %s73, %s75
      %p79 = scmp.eq.s32.totalorder %s18, 0
      %p80 = por %p78, %p79
      %p81 = scmp.ne.s32.totalorder %s73, %s75
      %p82 = scmp.eq.s32.totalorder %s23, 1
      %p83 = por %p81, %p82
      %p84 = scmp.ne.s32.totalorder %s75, %s76
      %p85 = scmp.eq.s32.totalorder %s23, 0
      %p86 = por %p84, %p85
      %p87 = scmp.ne.s32.totalorder %s75, %s76
      %p88 = scmp.eq.s32.totalorder %s24, 1
      %p89 = por %p87, %p88
      %p91 = scmp.ne.s32.totalorder %s76, %s90
      %p92 = scmp.eq.s32.totalorder %s24, 0
      %p93 = por %p91, %p92
      %s95 = sadd.s32 %s94, 1
      %p98 = scmp.eq.s32.totalorder %s18, 1
      %p99 = scmp.ne.s32.totalorder %s94, %s96
      %p100 = scmp.eq.s32.totalorder %s18, 0
      %p101 = por %p99, %p100
      %p102 = scmp.ne.s32.totalorder %s94, %s96
      %p103 = scmp.eq.s32.totalorder %s23, 1
      %p104 = por %p102, %p103
      %p105 = scmp.ne.s32.totalorder %s96, %s97
      %p106 = scmp.eq.s32.totalorder %s23, 0
      %p107 = por %p105, %p106
      %p108 = scmp.ne.s32.totalorder %s96, %s97
      %p109 = scmp.eq.s32.totalorder %s24, 1
      %p110 = por %p108, %p109
      %p112 = scmp.ne.s32.totalorder %s97, %s111
      %p113 = scmp.eq.s32.totalorder %s24, 0
      %p114 = por %p112, %p113
      %s116 = sadd.s32 %s115, 1
      %p119 = scmp.eq.s32.totalorder %s18, 1
      %p120 = scmp.ne.s32.totalorder %s115, %s117
      %p121 = scmp.eq.s32.totalorder %s18, 0
      %p122 = por %p120, %p121
      %p123 = scmp.ne.s32.totalorder %s115, %s117
      %p124 = scmp.eq.s32.totalorder %s23, 1
      %p125 = por %p123, %p124
      %p126 = scmp.ne.s32.totalorder %s117, %s118
      %p127 = scmp.eq.s32.totalorder %s23, 0
      %p128 = por %p126, %p127
      %p129 = scmp.ne.s32.totalorder %s117, %s118
      %p130 = scmp.eq.s32.totalorder %s24, 1
      %p131 = por %p129, %p130
      %p133 = scmp.ne.s32.totalorder %s118, %s132
      %p134 = scmp.eq.s32.totalorder %s24, 0
      %p135 = por %p133, %p134
      %s136 = ssub.s32 %s18, %s25
      %p137 = scmp.eq.s32.totalorder %s136, 0
      %s139 = sadd.s32 %s138, 1
      %s140 = scalar_select %p137, %s138, %s139
      %p143 = pneg %p137
      %p144 = scmp.eq.s32.totalorder %s18, 1
      %p145 = por %p143, %p144
      %p146 = scmp.ne.s32.totalorder %s138, %s141
      %p147 = scmp.eq.s32.totalorder %s18, 0
      %p148 = por %p146, %p147
      %p149 = scmp.ne.s32.totalorder %s138, %s141
      %p150 = scmp.eq.s32.totalorder %s23, 1
      %p151 = por %p149, %p150
      %p152 = scmp.ne.s32.totalorder %s141, %s142
      %p153 = scmp.eq.s32.totalorder %s23, 0
      %p154 = por %p152, %p153
      %p155 = scmp.ne.s32.totalorder %s141, %s142
      %p156 = scmp.eq.s32.totalorder %s24, 1
      %p157 = por %p155, %p156
      %p159 = scmp.ne.s32.totalorder %s142, %s158
      %p160 = scmp.eq.s32.totalorder %s24, 0
      %p161 = por %p159, %p160
      %p162 = scmp.le.s32.totalorder 1, %s18
      %p163 = scmp.lt.s32.totalorder %s18, 3
      %p164 = pnand %p162, %p163
      %p165 = pneg %p164
      // Predicated region
      $region9: #{_mlp_forward.1} parent=5 // pred_check
        _
      $region10: #{_mlp_forward.1} parent=5 // pred_check_branch
        %167 = sbr.rel (%p164) target = $region12
      $region11: #{_mlp_forward.1} parent=5 // pred_region
        %s168 = ssub.s32 %s18, 1
        // Predicated region
        $region13: #{_mlp_forward.1} parent=11 // pred_check
          %p169 = pneg %p65
        $region14: #{_mlp_forward.1} parent=11 // pred_check_branch
          %171 = sbr.rel (%p169) target = $region16
        $region15: #{_mlp_forward.1} parent=11 // pred_region
          %173 = vsyncadd [#allocation6], 0
          %s174 = sshll.u32 %s1, 4
          %s175 = int_to_ptr.hbm [resolvable:$true] %s174
          %s176 = sshll.u32 [#allocation5], 4
          %s177 = int_to_ptr.vmem [resolvable:$true] %s176
          %182 = dma.hbm_to_vmem [thread:$0]  %s175, 256, %s177, [#allocation6], 64, 64, 4
        $region16: #{_mlp_forward.1} parent=11 // pred_fallthru
          _
        // Predicated region
        $region17: #{_mlp_forward.1} parent=11 // pred_check
          %p183 = pneg %p86
        $region18: #{_mlp_forward.1} parent=11 // pred_check_branch
          %185 = sbr.rel (%p183) target = $region20
        $region19: #{_mlp_forward.1} parent=11 // pred_region
          _
        $region20: #{_mlp_forward.1} parent=11 // pred_fallthru
          _
        // Predicated region
        $region21: #{_mlp_forward.1} parent=11 // pred_check
          %p186 = pneg %p107
        $region22: #{_mlp_forward.1} parent=11 // pred_check_branch
          %188 = sbr.rel (%p186) target = $region24
        $region23: #{_mlp_forward.1} parent=11 // pred_region
          %190 = vsyncadd [#allocation6], 0
          %s191 = sshll.u32 %s3, 4
          %s192 = int_to_ptr.hbm [resolvable:$true] %s191
          %s193 = sshll.u32 [#allocation7], 4
          %s194 = int_to_ptr.vmem [resolvable:$true] %s193
          %199 = dma.hbm_to_vmem [thread:$0]  %s192, 1024, %s194, [#allocation6], 64, 64, 4
        $region24: #{_mlp_forward.1} parent=11 // pred_fallthru
          _
        // Predicated region
        $region25: #{_mlp_forward.1} parent=11 // pred_check
          %p200 = pneg %p128
        $region26: #{_mlp_forward.1} parent=11 // pred_check_branch
          %202 = sbr.rel (%p200) target = $region28
        $region27: #{_mlp_forward.1} parent=11 // pred_region
          _
        $region28: #{_mlp_forward.1} parent=11 // pred_fallthru
          _
      $region12: #{_mlp_forward.1} parent=5 // pred_fallthru
        _
      %p203 = scmp.lt.s32.totalorder %s18, 2
      // Predicated region
      $region29: #{_mlp_forward.1} parent=5 // pred_check
        %p204 = pneg %p203
      $region30: #{_mlp_forward.1} parent=5 // pred_check_branch
        %206 = sbr.rel (%p204) target = $region32
      $region31: #{_mlp_forward.1} parent=5 // pred_region
        // Predicated region
        $region33: #{_mlp_forward.1} parent=31 // pred_check
          %p207 = pneg %p38
        $region34: #{_mlp_forward.1} parent=31 // pred_check_branch
          %209 = sbr.rel (%p207) target = $region36
        $region35: #{_mlp_forward.1} parent=31 // pred_region
          %s210 = sand.u32 %s28, 1
          %s211 = scalar_lea.sflag [#allocation3], %s210
          %s212 = sand.u32 %s28, 1
          %s213 = smul.addr %s212, 8
          %s214 = scalar_lea.vmem [#allocation2], %s213
          %216 = vsyncadd %s211, 0
          %s217 = smul.addr %s18, 8
          %s218 = scalar_lea.hbm %s0, %s217
          %s220 = sshll.u32 %s218, 4
          %s221 = int_to_ptr.hbm [resolvable:$true] %s220
          %s222 = sshll.u32 %s214, 4
          %s223 = int_to_ptr.vmem [resolvable:$true] %s222
          %225 = dma.hbm_to_vmem [thread:$0]  %s221, 128, %s223, %s211
        $region36: #{_mlp_forward.1} parent=31 // pred_fallthru
          _
      $region32: #{_mlp_forward.1} parent=5 // pred_fallthru
        _
      %p226 = scmp.le.s32.totalorder 1, %s18
      %p227 = scmp.lt.s32.totalorder %s18, 3
      %p228 = pnand %p226, %p227
      %p229 = pneg %p228
      // Predicated region
      $region37: #{_mlp_forward.1} parent=5 // pred_check
        _
      $region38: #{_mlp_forward.1} parent=5 // pred_check_branch
        %231 = sbr.rel (%p228) target = $region40
      $region39: #{_mlp_forward.1} parent=5 // pred_region
        %s232 = ssub.s32 %s18, 1
        %s233 = sand.u32 %s31, 1
        %s234 = scalar_lea.sflag [#allocation3], %s233
        %s235 = sand.u32 %s31, 1
        %s236 = smul.addr %s235, 8
        %s237 = scalar_lea.vmem [#allocation2], %s236
        // Predicated region
        $region41: #{_mlp_forward.1} parent=39 // pred_check
          %p238 = pneg %p44
        $region42: #{_mlp_forward.1} parent=39 // pred_check_branch
          %240 = sbr.rel (%p238) target = $region44
        $region43: #{_mlp_forward.1} parent=39 // pred_region
          %242 = dma.done %s234, 128
        $region44: #{_mlp_forward.1} parent=39 // pred_fallthru
          _
        // Predicated region
        $region45: #{_mlp_forward.1} parent=39 // pred_check
          %p243 = pneg %p65
        $region46: #{_mlp_forward.1} parent=39 // pred_check_branch
          %245 = sbr.rel (%p243) target = $region48
        $region47: #{_mlp_forward.1} parent=39 // pred_region
          %247 = dma.done [#allocation6], 256
        $region48: #{_mlp_forward.1} parent=39 // pred_fallthru
          _
        // Predicated region
        $region49: #{_mlp_forward.1} parent=39 // pred_check
          %p248 = pneg %p107
        $region50: #{_mlp_forward.1} parent=39 // pred_check_branch
          %250 = sbr.rel (%p248) target = $region52
        $region51: #{_mlp_forward.1} parent=39 // pred_region
          %252 = dma.done [#allocation6], 1024
        $region52: #{_mlp_forward.1} parent=39 // pred_fallthru
          _
        %s253 = sand.u32 %s31, 1
        %s254 = scalar_lea.sflag [#allocation3], %s253
        %s255 = sand.u32 %s31, 1
        %s256 = smul.addr %s255, 8
        %s257 = scalar_lea.vmem [#allocation2], %s256
        %p258 = pneg %p44
        %p259 = pneg %p41
        %p260 = pneg %p65
        %p261 = pneg %p62
        %p262 = pneg %p86
        %p263 = pneg %p83
        %p264 = pneg %p107
        %p265 = pneg %p104
        %p266 = pneg %p128
        %p267 = pneg %p125
        %p268 = pneg %p154
        %p269 = pneg %p151
        %s270 = sand.u32 %s141, 1
        %s271 = scalar_lea.sflag [#allocation4], %s270
        %s272 = sand.u32 %s141, 1
        %s273 = smul.addr %s272, 8
        %s274 = scalar_lea.vmem [#allocation8], %s273
        %v276 = vld [vmem:[%s237] sm:$0xff]
        %v277 = vld [vmem:[#allocation5] sm:$0xf]
        %v278 = vld [vmem:[#allocation5 + $0x4] sm:$0xf]
        %v279 = vld [vmem:[#allocation5 + $0x8] sm:$0xf]
        %v280 = vld [vmem:[#allocation5 + $0xc] sm:$0xf]
        %v281 = vld [vmem:[%s2] sm:$0x1]
        %v282 = vpack.c.bf16 %v276, %v276
        %v284 = vperm.slane %v281, 0
        %v290 = vunpack.c.l.b16 %v277
        %v291 = vunpack.c.l.b16 %v278
        %v292 = vunpack.c.l.b16 %v279
        %v293 = vunpack.c.l.b16 %v280
        %v294 = vpack.c.b16 %v291, %v290
        %v295 = vpack.c.b16 %v293, %v292
        %vm298 = vcmask 261120
        %v300 = vsel %vm298, %v282, 0
        %302 = vmatpush.bf16.msra.mxu0 0
        %303 = vmatpush.bf16.msra.mxu0 0
        %304 = vmatpush.bf16.msra.mxu0 0
        %305 = vmatpush.bf16.msra.mxu0 0
        %306 = vmatpush.bf16.msra.mxu0 0
        %307 = vmatpush.bf16.msra.mxu0 0
        %308 = vmatpush.bf16.msra.mxu0 %v295
        %309 = vmatpush.bf16.msra.mxu0 %v294
        %310 = vmatmul.bf16.gmra.mxu0 %v300
        %v311 = vpop.f32.mrf.mxu0
        %v312 = vadd.f32 %v284, %v311
        %v313 = vpop.f32.mrf.mxu0
        %314 = vdwg.mxu0
        %v315 = vmax.f32 %v312, 0.0
        %v316 = vld [vmem:[#allocation7] sm:$0xf]
        %v317 = vld [vmem:[#allocation7 + $0x4] sm:$0xf]
        %v318 = vld [vmem:[#allocation7 + $0x8] sm:$0xf]
        %v319 = vld [vmem:[#allocation7 + $0xc] sm:$0xf]
        %v320 = vld [vmem:[#allocation7 + $0x10] sm:$0xf]
        %v321 = vld [vmem:[#allocation7 + $0x14] sm:$0xf]
        %v322 = vld [vmem:[#allocation7 + $0x18] sm:$0xf]
        %v323 = vld [vmem:[#allocation7 + $0x1c] sm:$0xf]
        %v324 = vld [vmem:[#allocation7 + $0x20] sm:$0xf]
        %v325 = vld [vmem:[#allocation7 + $0x24] sm:$0xf]
        %v326 = vld [vmem:[#allocation7 + $0x28] sm:$0xf]
        %v327 = vld [vmem:[#allocation7 + $0x2c] sm:$0xf]
        %v328 = vld [vmem:[#allocation7 + $0x30] sm:$0xf]
        %v329 = vld [vmem:[#allocation7 + $0x34] sm:$0xf]
        %v330 = vld [vmem:[#allocation7 + $0x38] sm:$0xf]
        %v331 = vld [vmem:[#allocation7 + $0x3c] sm:$0xf]
        %v332 = vld [vmem:[%s4] sm:$0x1]
        %v333 = vpack.c.bf16 %v315, %v315
        %v335 = vperm.slane %v332, 0
        %v353 = vunpack.c.l.b16 %v316
        %v354 = vunpack.c.l.b16 %v317
        %v355 = vunpack.c.l.b16 %v318
        %v356 = vunpack.c.l.b16 %v319
        %v357 = vunpack.c.l.b16 %v320
        %v358 = vunpack.c.l.b16 %v321
        %v359 = vunpack.c.l.b16 %v322
        %v360 = vunpack.c.l.b16 %v323
        %v361 = vunpack.c.l.b16 %v324
        %v362 = vunpack.c.l.b16 %v325
        %v363 = vunpack.c.l.b16 %v326
        %v364 = vunpack.c.l.b16 %v327
        %v365 = vunpack.c.l.b16 %v328
        %v366 = vunpack.c.l.b16 %v329
        %v367 = vunpack.c.l.b16 %v330
        %v368 = vunpack.c.l.b16 %v331
        %v369 = vpack.c.b16 %v354, %v353
        %v370 = vpack.c.b16 %v356, %v355
        %v371 = vpack.c.b16 %v358, %v357
        %v372 = vpack.c.b16 %v360, %v359
        %v373 = vpack.c.b16 %v362, %v361
        %v374 = vpack.c.b16 %v364, %v363
        %v375 = vpack.c.b16 %v366, %v365
        %v376 = vpack.c.b16 %v368, %v367
        %385 = vmatpush.bf16.msra.mxu0 %v376
        %386 = vmatpush.bf16.msra.mxu0 %v375
        %387 = vmatpush.bf16.msra.mxu0 %v374
        %388 = vmatpush.bf16.msra.mxu0 %v373
        %389 = vmatpush.bf16.msra.mxu0 %v372
        %390 = vmatpush.bf16.msra.mxu0 %v371
        %391 = vmatpush.bf16.msra.mxu0 %v370
        %392 = vmatpush.bf16.msra.mxu0 %v369
        %393 = vmatmul.bf16.gmra.mxu0 %v333
        %v394 = vpop.f32.mrf.mxu0
        %v395 = vadd.f32 %v335, %v394
        %v396 = vpop.f32.mrf.mxu0
        %397 = vdwg.mxu0
        %v398 = vmax.f32 %v395, 0.0
        %399 = vst [vmem:[%s274] sm:$0xff] %v398
        %s400 = sand.u32 %s141, 1
        %s401 = scalar_lea.sflag [#allocation4], %s400
        %s402 = sand.u32 %s141, 1
        %s403 = smul.addr %s402, 8
        %s404 = scalar_lea.vmem [#allocation8], %s403
        // Predicated region
        $region53: #{_mlp_forward.1} parent=39 // pred_check
          %p405 = pneg %p151
        $region54: #{_mlp_forward.1} parent=39 // pred_check_branch
          %407 = sbr.rel (%p405) target = $region56
        $region55: #{_mlp_forward.1} parent=39 // pred_region
          %409 = vsyncadd %s401, 0
          %s410 = smul.addr %s23, 8
          %s411 = scalar_lea.hbm %s5, %s410
          %s413 = sshll.u32 %s404, 4
          %s414 = int_to_ptr.vmem [resolvable:$true] %s413
          %s415 = sshll.u32 %s411, 4
          %s416 = int_to_ptr.hbm [resolvable:$true] %s415
          %418 = dma.vmem_to_hbm [thread:$0]  %s414, 128, %s416, %s401
        $region56: #{_mlp_forward.1} parent=39 // pred_fallthru
          _
      $region40: #{_mlp_forward.1} parent=5 // pred_fallthru
        _
      %p419 = scmp.le.s32.totalorder 2, %s18
      // Predicated region
      $region57: #{_mlp_forward.1} parent=5 // pred_check
        %p420 = pneg %p419
      $region58: #{_mlp_forward.1} parent=5 // pred_check_branch
        %422 = sbr.rel (%p420) target = $region60
      $region59: #{_mlp_forward.1} parent=5 // pred_region
        %s423 = ssub.s32 %s18, 2
        // Predicated region
        $region61: #{_mlp_forward.1} parent=59 // pred_check
          %p424 = pneg %p157
        $region62: #{_mlp_forward.1} parent=59 // pred_check_branch
          %426 = sbr.rel (%p424) target = $region64
        $region63: #{_mlp_forward.1} parent=59 // pred_region
          %s427 = sand.u32 %s142, 1
          %s428 = scalar_lea.sflag [#allocation4], %s427
          %s429 = sand.u32 %s142, 1
          %s430 = smul.addr %s429, 8
          %s431 = scalar_lea.vmem [#allocation8], %s430
          %433 = dma.done %s428, 128
        $region64: #{_mlp_forward.1} parent=59 // pred_fallthru
          _
      $region60: #{_mlp_forward.1} parent=5 // pred_fallthru
        _
    $region6: #{_mlp_forward.1} parent=1 // loop_footer
      %s22 = sadd.s32 1, %s18
    $region7: #{_mlp_forward.1} parent=1 // loop_footer_branch
      %17 = sbr.rel target = $region3
    $region8: #{_mlp_forward.1} parent=1 // loop_exit
      _
    %434 = vsyncpa [#allocation3], 1
    %s435 = scalar_lea.sflag [#allocation3], 1
    %436 = vsyncpa %s435, 1
    %437 = vsyncpa [#allocation6], 1
    %438 = vsyncpa [#allocation4], 1
    %s439 = scalar_lea.sflag [#allocation4], 1
    %440 = vsyncpa %s439, 1

</llo_original>
